<compile_context>
chip_gen: v5e
topology: v5e:2x2
jax: 0.10.0
libtpu: 0.0.40
codegen_flags: <defaults>
</compile_context>

<pallas_src>
import functools

import jax
import jax.numpy as jnp
from jax.experimental import pallas as pl
from jax.experimental.pallas import tpu as pltpu

_LANE = 128


def _pair(x):
    return (x, x) if isinstance(x, int) else tuple(x)


def _round_up(x, m):
    return ((x + m - 1) // m) * m


def _cdiv(a, b):
    return -(-a // b)


def _device_config():
    kind = jax.devices()[0].device_kind.lower()
    if "v7" in kind or "7x" in kind:
        # 64 MiB physical VMEM, 2 TensorCores per chip.
        return dict(tm=512, tk=512, budget=36 << 20, vmem_limit=48 << 20, cores=2)
    if "v6" in kind:
        return dict(tm=512, tk=512, budget=72 << 20, vmem_limit=96 << 20, cores=1)
    if "v5" in kind:
        return dict(tm=512, tk=512, budget=72 << 20, vmem_limit=96 << 20, cores=1)
    # Unknown generation: conservative tiles, keep the scoped-VMEM default.
    return dict(tm=256, tk=256, budget=12 << 20, vmem_limit=None, cores=1)


def _tm_candidates(tm_max, M):
    top = min(tm_max, max(8, _round_up(M, 8)))
    top = max(8, (top // 8) * 8)
    cands = []
    t = top
    while True:
        cands.append(t)
        if t <= 128:
            break
        t = max(128, _round_up(t // 2, 8))
    return cands


def _tn_candidates(Np):
    cands = [Np]
    for t in (1024, 512, 256, _LANE):
        if t < Np:
            cands.append(t)
    return cands


def _plan(M, Kg, OCg, p_esize, w_esize, o_esize, cfg, force_ktiled=False):
    """Pick strategy, tiles and padded K/N so the working set fits VMEM."""
    Kp = _round_up(Kg, _LANE)
    Np = _round_up(OCg, _LANE)
    budget = cfg["budget"]

    def simple_bytes(tm, tn):
        # double-buffered patch slab + resident weight panel + out tile + bias
        return (2 * tm * Kp * p_esize + 2 * Kp * tn * w_esize
                + 2 * tm * tn * o_esize + 2 * 8 * tn * 4)

    if not force_ktiled:
        for tm in _tm_candidates(cfg["tm"], M):
            for tn in _tn_candidates(Np):
                if simple_bytes(tm, tn) <= budget:
                    return dict(strategy="simple", tm=tm, tn=tn, Kp=Kp, Np=Np)

    # --- K-tiled fallback (huge reduction dim): f32 VMEM accumulator.
    tk_cap = _LANE if force_ktiled else cfg["tk"]
    tk = min(tk_cap, Kp)
    Kp = _round_up(Kg, tk)              # pad K up (exact reduction), keep tk large
    tn = min(512, Np)
    tm = _tm_candidates(cfg["tm"], M)[0]

    def kt_bytes(tm, tn, tk):
        return (2 * tm * tk * p_esize + 2 * tk * tn * w_esize
                + 2 * tm * tn * o_esize + tm * tn * 4 + 2 * 8 * tn * 4)

    for cand in _tm_candidates(cfg["tm"], M):
        tm = cand
        if kt_bytes(tm, tn, tk) <= budget:
            break
    while kt_bytes(tm, tn, tk) > budget and tn > _LANE:
        tn = max(_LANE, (tn // 2) // _LANE * _LANE)
    while kt_bytes(tm, tn, tk) > budget and tk > _LANE:
        tk = max(_LANE, (tk // 2) // _LANE * _LANE)
        Kp = _round_up(Kg, tk)
    return dict(strategy="ktiled", tm=tm, tn=tn, tk=tk, Kp=Kp, Np=Np)


# ---------------------------------------------------------------------------
# Pallas kernels
# ---------------------------------------------------------------------------
def _simple_kernel(p_ref, w_ref, o_ref):
    # p_ref: (tm, Kp)  w_ref: (Kp, tn)  o_ref: (tm, tn)
    o_ref[...] = jnp.dot(
        p_ref[...], w_ref[...], preferred_element_type=jnp.float32
    ).astype(o_ref.dtype)


def _simple_bias_kernel(p_ref, w_ref, b_ref, o_ref):
    acc = jnp.dot(p_ref[...], w_ref[...], preferred_element_type=jnp.float32)
    o_ref[...] = (acc + b_ref[...].astype(jnp.float32)).astype(o_ref.dtype)


def _ktiled_kernel(p_ref, w_ref, b_ref, o_ref, acc_ref):
    # p_ref: (tm, tk)  w_ref: (tk, tn)  b_ref: (1, tn)
    # o_ref: (tm, tn)  acc_ref: (tm, tn) f32
    k = pl.program_id(3)
    prod = jnp.dot(p_ref[...], w_ref[...], preferred_element_type=jnp.float32)

    @pl.when(k == 0)
    def _first():
        acc_ref[...] = prod            # no zero-fill + add on the first step

    @pl.when(k > 0)
    def _acc():
        acc_ref[...] += prod

    @pl.when(k == pl.num_programs(3) - 1)
    def _done():
        o_ref[...] = (acc_ref[...] + b_ref[...].astype(jnp.float32)).astype(o_ref.dtype)


# ---------------------------------------------------------------------------
# pallas_call builders
# ---------------------------------------------------------------------------
def _conv_matmul_simple(patches, weight, bias, out_dtype, plan, cfg):
    """patches: (G, M, Kp), weight: (G, Kp, Np), bias: (G, 1, Np) or None."""
    G, M, Kp = patches.shape
    Np = weight.shape[2]
    tm, tn = plan["tm"], plan["tn"]
    mt, nt = _cdiv(M, tm), _cdiv(Np, tn)

    in_specs = [
        pl.BlockSpec((None, tm, Kp), lambda g, i, j: (g, i, 0)),  # patch slab (read once)
        pl.BlockSpec((None, Kp, tn), lambda g, i, j: (g, 0, j)),  # resident weight panel
    ]
    args = [patches, weight]
    kernel = _simple_kernel
    if bias is not None:
        in_specs.append(pl.BlockSpec((None, 1, tn), lambda g, i, j: (g, 0, j)))
        args.append(bias)
        kernel = _simple_bias_kernel

    p_bytes = patches.size * patches.dtype.itemsize
    w_bytes = weight.size * weight.dtype.itemsize
    b_bytes = 0 if bias is None else bias.size * bias.dtype.itemsize
    o_bytes = G * M * Np * jnp.dtype(out_dtype).itemsize
    bytes_accessed = p_bytes + (mt if nt > 1 else 1) * w_bytes + b_bytes + o_bytes
    flops = 2 * G * M * Np * Kp

    ckw = dict(dimension_semantics=("parallel", "parallel", "parallel"))
    if cfg["vmem_limit"] is not None:
        ckw["vmem_limit_bytes"] = cfg["vmem_limit"]

    return pl.pallas_call(
        kernel,
        out_shape=jax.ShapeDtypeStruct((G, M, Np), out_dtype),
        grid_spec=pltpu.PrefetchScalarGridSpec(
            num_scalar_prefetch=0,
            grid=(G, mt, nt),
            in_specs=in_specs,
            out_specs=pl.BlockSpec((None, tm, tn), lambda g, i, j: (g, i, j)),
        ),
        compiler_params=pltpu.CompilerParams(**ckw),
        cost_estimate=pl.CostEstimate(
            flops=flops, transcendentals=0, bytes_accessed=bytes_accessed),
    )(*args)


def _conv_matmul_ktiled(patches, weight, bias, out_dtype, plan, cfg):
    """Fallback for very large K: grid (G, Nt, Mt, Kt), f32 accumulator."""
    G, M, Kp = patches.shape
    Np = weight.shape[2]
    tm, tn, tk = plan["tm"], plan["tn"], plan["tk"]
    mt, nt, kt = _cdiv(M, tm), _cdiv(Np, tn), Kp // tk

    flops = 2 * G * M * Np * Kp
    bytes_accessed = (nt * patches.size * patches.dtype.itemsize
                      + weight.size * weight.dtype.itemsize
                      + bias.size * bias.dtype.itemsize
                      + G * M * Np * jnp.dtype(out_dtype).itemsize)

    ckw = dict(dimension_semantics=("parallel", "parallel", "parallel", "arbitrary"))
    if cfg["vmem_limit"] is not None:
        ckw["vmem_limit_bytes"] = cfg["vmem_limit"]

    return pl.pallas_call(
        _ktiled_kernel,
        out_shape=jax.ShapeDtypeStruct((G, M, Np), out_dtype),
        grid_spec=pltpu.PrefetchScalarGridSpec(
            num_scalar_prefetch=0,
            grid=(G, nt, mt, kt),
            in_specs=[
                pl.BlockSpec((None, tm, tk), lambda g, j, i, k: (g, i, k)),
                pl.BlockSpec((None, tk, tn), lambda g, j, i, k: (g, k, j)),
                pl.BlockSpec((None, 1, tn), lambda g, j, i, k: (g, 0, j)),
            ],
            out_specs=pl.BlockSpec((None, tm, tn), lambda g, j, i, k: (g, i, j)),
            scratch_shapes=[pltpu.VMEM((tm, tn), jnp.float32)],
        ),
        compiler_params=pltpu.CompilerParams(**ckw),
        cost_estimate=pl.CostEstimate(
            flops=flops, transcendentals=0, bytes_accessed=bytes_accessed),
    )(patches, weight, bias)


# ---------------------------------------------------------------------------
# conv2d = im2col (XLA glue) + grouped Pallas matmul (hot path)
# ---------------------------------------------------------------------------
def conv2d_pallas(x, weight, bias=None, stride=1, padding=0, dilation=1,
                  groups=1, compute_dtype="auto", _force_ktiled=False):
    N, C, H, W = x.shape
    OC, Cg, KH, KW = weight.shape
    sh, sw = _pair(stride)
    ph, pw = _pair(padding)
    dh, dw = _pair(dilation)
    assert C % groups == 0 and OC % groups == 0 and Cg == C // groups

    OH = (H + 2 * ph - dh * (KH - 1) - 1) // sh + 1
    OW = (W + 2 * pw - dw * (KW - 1) - 1) // sw + 1
    G, OCg = groups, OC // groups
    Kg = Cg * KH * KW
    M = N * OH * OW
    out_dtype = x.dtype

    if compute_dtype == "auto":
        # bf16 operands by default (MXU-native on v5e/v6e/v7x); accumulation
        # stays f32 in-kernel and the output keeps the input dtype.
        compute_dtype = jnp.bfloat16
    if compute_dtype is not None:
        x = x.astype(compute_dtype)
        weight = weight.astype(compute_dtype)

    cfg = _device_config()
    p_esize = jnp.dtype(x.dtype).itemsize
    w_esize = jnp.dtype(weight.dtype).itemsize
    o_esize = jnp.dtype(out_dtype).itemsize
    plan = _plan(M, Kg, OCg, p_esize, w_esize, o_esize, cfg,
                 force_ktiled=_force_ktiled)

    # v7x: make sure at least one parallel grid axis has extent >= 2 so the
    # work shards across both TensorCores.
    if cfg["cores"] > 1 and plan["strategy"] == "simple":
        mt = _cdiv(M, plan["tm"])
        nt = _cdiv(plan["Np"], plan["tn"])
        if G * mt * nt < cfg["cores"] and M > 8:
            plan["tm"] = max(8, _round_up(_cdiv(M, cfg["cores"]), 8))

    Kp, Np = plan["Kp"], plan["Np"]

    # --- im2col in the compute dtype (NHWC so channels land on lanes);
    #     feature order = (c, kh, kw), matching weight.reshape(OC, Cg*KH*KW).
    xp = jnp.pad(x, ((0, 0), (0, 0), (ph, ph), (pw, pw)))
    xp = xp.transpose(0, 2, 3, 1)                        # (N, Hp, Wp, C)
    cols = []
    for i in range(KH):
        for j in range(KW):
            cols.append(xp[:, i * dh: i * dh + (OH - 1) * sh + 1: sh,
                              j * dw: j * dw + (OW - 1) * sw + 1: sw, :])
    patches = jnp.stack(cols, axis=-1)                   # (N, OH, OW, C, KH*KW)
    patches = patches.reshape(M, G, Kg).transpose(1, 0, 2)   # (G, M, Kg)
    if Kp != Kg:
        # zero-pad only the reduction dim so the matmul stays exact;
        # M stays ragged (Pallas masks edge blocks).
        patches = jnp.pad(patches, ((0, 0), (0, 0), (0, Kp - Kg)))

    wmat = weight.reshape(G, OCg, Kg).transpose(0, 2, 1)      # (G, Kg, OCg)
    wmat = jnp.pad(wmat, ((0, 0), (0, Kp - Kg), (0, Np - OCg)))

    bmat = None
    if bias is not None:
        bmat = jnp.pad(bias.astype(jnp.float32).reshape(G, 1, OCg),
                       ((0, 0), (0, 0), (0, Np - OCg)))

    if plan["strategy"] == "simple":
        out = _conv_matmul_simple(patches, wmat, bmat, out_dtype, plan, cfg)
    else:
        if bmat is None:
            bmat = jnp.zeros((G, 1, Np), jnp.float32)
        out = _conv_matmul_ktiled(patches, wmat, bmat, out_dtype, plan, cfg)

    out = out[:, :, :OCg]                                # no-op when OCg % 128 == 0
    out = out.transpose(1, 0, 2).reshape(N, OH, OW, OC)
    return out.transpose(0, 3, 1, 2)                     # NCHW


# ---------------------------------------------------------------------------
# Module equivalent (non-quantized Conv2d branch of _hook_parameters)
# ---------------------------------------------------------------------------
class Conv2dPallas:
    def __init__(self, in_channels, out_channels, kernel_size, stride=1,
                 padding=0, dilation=1, groups=1, bias=False, key=None,
                 compute_dtype="auto"):
        self.kh, self.kw = _pair(kernel_size)
        self.in_channels, self.out_channels = in_channels, out_channels
        self.stride = _pair(stride)
        self.padding = _pair(padding)
        self.dilation = _pair(dilation)
        self.groups = groups
        self.compute_dtype = compute_dtype
        assert in_channels % groups == 0
        key = jax.random.PRNGKey(0) if key is None else key
        # quantized=False path: weight = randn(out, in//groups, kh, kw)
        self.weight = jax.random.normal(
            key, (out_channels, in_channels // groups, self.kh, self.kw),
            dtype=jnp.float32)
        self.bias = jnp.zeros((out_channels,), jnp.float32) if bias else None
        # TODO(synk): quantized 'by value'/'by bit' branches rely on
        # categorical_sample / init_alpha / reset_parameters which are not
        # defined in the source module; only quantized=False is implemented.
        self._fwd = jax.jit(functools.partial(
            conv2d_pallas, stride=self.stride, padding=self.padding,
            dilation=self.dilation, groups=self.groups,
            compute_dtype=self.compute_dtype))

    def __call__(self, x):
        return self._fwd(x, self.weight, self.bias)


if __name__ == "__main__":
    key = jax.random.PRNGKey(0)
    kx, kw1, kx2, kw2, kb2, kx4, kw4 = jax.random.split(key, 7)

    def conv_ref(x, w, stride, padding, dilation, groups, bias=None,
                 operand_dtype=None):
        xr, wr = x, w
        if operand_dtype is not None:
            xr = xr.astype(operand_dtype)
            wr = wr.astype(operand_dtype)
        out = jax.lax.conv_general_dilated(
            xr, wr, window_strides=stride,
            padding=[(padding[0], padding[0]), (padding[1], padding[1])],
            rhs_dilation=dilation,
            dimension_numbers=("NCHW", "OIHW", "NCHW"),
            feature_group_count=groups,
            preferred_element_type=jnp.float32)
        if bias is not None:
            out = out + bias[None, :, None, None]
        return out

    # Case 1: standard conv — batch=2, channels 4->8, 16x16, 3x3, pad=1
    # (default bf16 operands, f32 accumulation).
    x = jax.random.normal(kx, (2, 4, 16, 16), dtype=jnp.float32)
    conv = Conv2dPallas(4, 8, kernel_size=3, stride=1, padding=1,
                        bias=False, key=kw1)
    y = jax.block_until_ready(conv(x))
    assert y.shape == (2, 8, 16, 16), y.shape
    ref = conv_ref(x, conv.weight, conv.stride, conv.padding, conv.dilation,
                   conv.groups, operand_dtype=jnp.bfloat16)
    assert jnp.allclose(y, ref, atol=2e-2, rtol=2e-2), \
        float(jnp.max(jnp.abs(y - ref)))

    # Case 2: grouped + strided conv with fused bias (default bf16 path).
    x2 = jax.random.normal(kx2, (2, 4, 16, 16), dtype=jnp.float32)
    conv2 = Conv2dPallas(4, 8, kernel_size=3, stride=2, padding=1, groups=2,
                         bias=True, key=kw2)
    conv2.bias = jax.random.normal(kb2, (8,), dtype=jnp.float32)
    y2 = jax.block_until_ready(conv2(x2))
    assert y2.shape == (2, 8, 8, 8), y2.shape
    ref2 = conv_ref(x2, conv2.weight, conv2.stride, conv2.padding,
                    conv2.dilation, conv2.groups, bias=conv2.bias,
                    operand_dtype=jnp.bfloat16)
    assert jnp.allclose(y2, ref2, atol=2e-2, rtol=2e-2), \
        float(jnp.max(jnp.abs(y2 - ref2)))

    # Case 3: explicit f32 compute (matches the original module's precision).
    y3 = jax.block_until_ready(
        conv2d_pallas(x, conv.weight, None, stride=conv.stride,
                      padding=conv.padding, dilation=conv.dilation,
                      groups=conv.groups, compute_dtype=jnp.float32))
    ref3 = conv_ref(x, conv.weight, conv.stride, conv.padding, conv.dilation,
                    conv.groups)
    assert jnp.allclose(y3, ref3, atol=1e-3, rtol=1e-3), \
        float(jnp.max(jnp.abs(y3 - ref3)))

    # Case 4: force the K-tiled fallback (multi-step reduction with the f32
    # VMEM accumulator) on a slightly larger-K conv to exercise that path.
    x4 = jax.random.normal(kx4, (1, 32, 8, 8), dtype=jnp.float32)
    w4 = jax.random.normal(kw4, (16, 32, 3, 3), dtype=jnp.float32)
    y4 = jax.block_until_ready(
        conv2d_pallas(x4, w4, None, stride=1, padding=1, _force_ktiled=True))
    assert y4.shape == (1, 16, 8, 8), y4.shape
    ref4 = conv_ref(x4, w4, (1, 1), (1, 1), (1, 1), 1,
                    operand_dtype=jnp.bfloat16)
    assert jnp.allclose(y4, ref4, atol=2e-2, rtol=2e-2), \
        float(jnp.max(jnp.abs(y4 - ref4)))

    print("KERNEL_OK")
</pallas_src>

<mosaic_0001>
module attributes {stable_mosaic.version = 11 : i64} {
  func.func @_simple_kernel(%arg0: i32, %arg1: i32, %arg2: i32, %arg3: memref<1x256x128xbf16, #tpu.memory_space<vmem>>, %arg4: memref<1x128x128xbf16, #tpu.memory_space<vmem>>, %arg5: memref<1x256x128xf32, #tpu.memory_space<vmem>>) attributes {dimension_semantics = [#tpu.dimension_semantics<parallel>, #tpu.dimension_semantics<parallel>, #tpu.dimension_semantics<parallel>], iteration_bounds = array<i64: 1, 2, 1>, scalar_prefetch = 0 : i64, scratch_operands = 0 : i64, tpu.core_type = #tpu.core_type<tc>, window_params = [{transform_indices = @transform_0, window_bounds = array<i64: 1, 256, 128>}, {transform_indices = @transform_1, window_bounds = array<i64: 1, 128, 128>}, {transform_indices = @transform_2, window_bounds = array<i64: 1, 256, 128>}]} {
    %c0 = arith.constant 0 : index
    %c0_0 = arith.constant 0 : index
    %c0_1 = arith.constant 0 : index
    %0 = vector.load %arg3[%c0, %c0_0, %c0_1] : memref<1x256x128xbf16, #tpu.memory_space<vmem>>, vector<1x256x128xbf16>
    %1 = vector.shape_cast %0 : vector<1x256x128xbf16> to vector<256x128xbf16>
    %c0_2 = arith.constant 0 : index
    %c0_3 = arith.constant 0 : index
    %c0_4 = arith.constant 0 : index
    %2 = vector.load %arg4[%c0_2, %c0_3, %c0_4] : memref<1x128x128xbf16, #tpu.memory_space<vmem>>, vector<1x128x128xbf16>
    %3 = vector.shape_cast %2 : vector<1x128x128xbf16> to vector<128x128xbf16>
    %cst = arith.constant dense<0.000000e+00> : vector<256x128xf32>
    %4 = tpu.matmul %1, %3, %cst {dimension_numbers = #tpu.dot_dimension_numbers<[1], [0], [0], [1], [0, 0, 1, 1], [], []>} : vector<256x128xbf16>, vector<128x128xbf16>, vector<256x128xf32> -> vector<256x128xf32>
    %c0_5 = arith.constant 0 : index
    %c0_6 = arith.constant 0 : index
    %c0_7 = arith.constant 0 : index
    %5 = vector.load %arg5[%c0_5, %c0_6, %c0_7] : memref<1x256x128xf32, #tpu.memory_space<vmem>>, vector<1x256x128xf32>
    %6 = vector.shape_cast %5 : vector<1x256x128xf32> to vector<256x128xf32>
    %7 = vector.shape_cast %4 : vector<256x128xf32> to vector<1x256x128xf32>
    tpu.vector_store %arg5[%c0_5, %c0_6, %c0_7], %7 {strides = array<i32>} : memref<1x256x128xf32, #tpu.memory_space<vmem>>, vector<1x256x128xf32>,
    return
  }
  func.func @transform_0(%arg0: i32, %arg1: i32, %arg2: i32) -> (i32, i32, i32) {
    %c0_i32 = arith.constant 0 : i32
    %c0_i32_0 = arith.constant 0 : i32
    return %arg0, %arg1, %c0_i32 : i32, i32, i32
  }
  func.func @transform_1(%arg0: i32, %arg1: i32, %arg2: i32) -> (i32, i32, i32) {
    %c0_i32 = arith.constant 0 : i32
    %c0_i32_0 = arith.constant 0 : i32
    return %arg0, %c0_i32, %arg2 : i32, i32, i32
  }
  func.func @transform_2(%arg0: i32, %arg1: i32, %arg2: i32) -> (i32, i32, i32) {
    %c0_i32 = arith.constant 0 : i32
    return %arg0, %arg1, %arg2 : i32, i32, i32
  }
}

</mosaic_0001>

<llo_original>
// kernel: conv2d_pallas.1
$region0: #{conv2d_pallas.1}
  #allocation0 [shape = 'u32[]', space=smem, size = 0x4, offset = 0x4, fixed_abs, tag = 'smem constant byte address 0x4 - core index']
  #allocation1 [shape = 'u32[72,128]{1,0:T(1,128)}', space=vmem, size = 0x9000, scoped, tag = 'internal scratch']
  %s0 = inlined_call_operand.vmem [shape: bf16[1,512,128], index: 0, kind: input, shape index: {}]
  %s1 = inlined_call_operand.vmem [shape: bf16[1,128,128], index: 1, kind: input, shape index: {}]
  %s2 = inlined_call_operand.vmem [shape: f32[1,512,128], index: 2, kind: output, shape index: {}]
  %s3 = sld [smem:[#allocation0]]
  $region41: #{conv2d_pallas.1} parent=0
    _
  %s5 = ssub.s32 1, %s3
  %s6 = scalar_select 0, %s5, %s3
  loop: start=0, step=1, limit=4
  $region2: #{conv2d_pallas.1} parent=0 // loop_pre_header
    _
  $region3: #{conv2d_pallas.1} parent=0 // loop_header
    %s8 = sphi 0, %s12
    %p9 = scmp.ge.s32.totalorder %s8, 4
    %s15 = sphi 0, %s34
    %s16 = sphi 0, %s30
    %s17 = sphi 0, %s26
    %s18 = sphi 0, %s15
    %s19 = sphi 0, %s16
    %s20 = sphi 0, %s17
    %s21 = sphi 0, %s18
    %s22 = sphi 0, %s19
    %s23 = sphi 0, %s20
    %s39 = sphi 0, %s41
    %s42 = sphi 0, %s39
    %s43 = sphi 0, %s42
    %s59 = sphi 0, %s43
    %s67 = sphi 0, %s69
    %s70 = sphi 0, %s67
    %s71 = sphi 0, %s70
    %s87 = sphi 0, %s71
    %s97 = sphi 0, %s99
    %s100 = sphi 0, %s97
    %s101 = sphi 0, %s100
    %s117 = sphi 0, %s101
  $region4: #{conv2d_pallas.1} parent=0 // loop_header_branch
    %11 = sbr.rel (%p9) target = $region8
  $region5: #{conv2d_pallas.1} parent=0 // loop_body
    %s13 = ssub.s32 %s8, 1
    %s14 = ssub.s32 %s8, 2
    %s24 = sadd.s32 1, %s17
    %p25 = scmp.ge.s32.totalorder %s24, 1
    %s26 = scalar_select %p25, 0, %s24
    %s27 = sadd.s32 1, %s16
    %s28 = scalar_select %p25, %s27, %s16
    %p29 = scmp.ge.s32.totalorder %s28, 2
    %s30 = scalar_select %p29, 0, %s28
    %s31 = sadd.s32 1, %s15
    %s32 = scalar_select %p29, %s31, %s15
    %p33 = scmp.ge.s32.totalorder %s32, 1
    %s34 = scalar_select %p33, 0, %s32
    %s35 = ssub.s32 %s15, %s34
    %s36 = ssub.s32 %s16, %s30
    %s37 = sor.u32 %s35, %s36
    %p38 = scmp.eq.s32.totalorder %s37, 0
    %s40 = sadd.s32 %s39, 1
    %s41 = scalar_select %p38, %s39, %s40
    %p44 = pneg %p38
    %p45 = scmp.eq.s32.totalorder %s8, 1
    %p46 = por %p44, %p45
    %p47 = scmp.ne.s32.totalorder %s39, %s42
    %p48 = scmp.eq.s32.totalorder %s8, 0
    %p49 = por %p47, %p48
    %p50 = scmp.ne.s32.totalorder %s39, %s42
    %p51 = scmp.eq.s32.totalorder %s13, 1
    %p52 = por %p50, %p51
    %p53 = scmp.ne.s32.totalorder %s42, %s43
    %p54 = scmp.eq.s32.totalorder %s13, 0
    %p55 = por %p53, %p54
    %p56 = scmp.ne.s32.totalorder %s42, %s43
    %p57 = scmp.eq.s32.totalorder %s14, 1
    %p58 = por %p56, %p57
    %p60 = scmp.ne.s32.totalorder %s43, %s59
    %p61 = scmp.eq.s32.totalorder %s14, 0
    %p62 = por %p60, %p61
    %s63 = ssub.s32 %s15, %s34
    %s64 = ssub.s32 %s17, %s26
    %s65 = sor.u32 %s63, %s64
    %p66 = scmp.eq.s32.totalorder %s65, 0
    %s68 = sadd.s32 %s67, 1
    %s69 = scalar_select %p66, %s67, %s68
    %p72 = pneg %p66
    %p73 = scmp.eq.s32.totalorder %s8, 1
    %p74 = por %p72, %p73
    %p75 = scmp.ne.s32.totalorder %s67, %s70
    %p76 = scmp.eq.s32.totalorder %s8, 0
    %p77 = por %p75, %p76
    %p78 = scmp.ne.s32.totalorder %s67, %s70
    %p79 = scmp.eq.s32.totalorder %s13, 1
    %p80 = por %p78, %p79
    %p81 = scmp.ne.s32.totalorder %s70, %s71
    %p82 = scmp.eq.s32.totalorder %s13, 0
    %p83 = por %p81, %p82
    %p84 = scmp.ne.s32.totalorder %s70, %s71
    %p85 = scmp.eq.s32.totalorder %s14, 1
    %p86 = por %p84, %p85
    %p88 = scmp.ne.s32.totalorder %s71, %s87
    %p89 = scmp.eq.s32.totalorder %s14, 0
    %p90 = por %p88, %p89
    %s91 = ssub.s32 %s15, %s34
    %s92 = ssub.s32 %s16, %s30
    %s93 = sor.u32 %s91, %s92
    %s94 = ssub.s32 %s17, %s26
    %s95 = sor.u32 %s93, %s94
    %p96 = scmp.eq.s32.totalorder %s95, 0
    %s98 = sadd.s32 %s97, 1
    %s99 = scalar_select %p96, %s97, %s98
    %p102 = pneg %p96
    %p103 = scmp.eq.s32.totalorder %s8, 1
    %p104 = por %p102, %p103
    %p105 = scmp.ne.s32.totalorder %s97, %s100
    %p106 = scmp.eq.s32.totalorder %s8, 0
    %p107 = por %p105, %p106
    %p108 = scmp.ne.s32.totalorder %s97, %s100
    %p109 = scmp.eq.s32.totalorder %s13, 1
    %p110 = por %p108, %p109
    %p111 = scmp.ne.s32.totalorder %s100, %s101
    %p112 = scmp.eq.s32.totalorder %s13, 0
    %p113 = por %p111, %p112
    %p114 = scmp.ne.s32.totalorder %s100, %s101
    %p115 = scmp.eq.s32.totalorder %s14, 1
    %p116 = por %p114, %p115
    %p118 = scmp.ne.s32.totalorder %s101, %s117
    %p119 = scmp.eq.s32.totalorder %s14, 0
    %p120 = por %p118, %p119
    %p121 = scmp.le.s32.totalorder 1, %s8
    %p122 = scmp.lt.s32.totalorder %s8, 3
    %p123 = pnand %p121, %p122
    %p124 = pneg %p123
    // Predicated region
    $region9: #{conv2d_pallas.1} parent=5 // pred_check
      _
    $region10: #{conv2d_pallas.1} parent=5 // pred_check_branch
      %126 = sbr.rel (%p123) target = $region12
    $region11: #{conv2d_pallas.1} parent=5 // pred_region
      %s127 = ssub.s32 %s8, 1
      // Predicated region
      $region13: #{conv2d_pallas.1} parent=11 // pred_check
        %p128 = pneg %p83
      $region14: #{conv2d_pallas.1} parent=11 // pred_check_branch
        %130 = sbr.rel (%p128) target = $region16
      $region15: #{conv2d_pallas.1} parent=11 // pred_region
        %p131 = scmp.lt.s32.totalorder %s18, 0
        %s132 = scalar_select %p131, %s18, 0
        %p133 = scmp.lt.s32.totalorder %s20, 0
        %s134 = scalar_select %p133, %s20, 0
        %s135 = smul.addr %s132, 16
        %s136 = sadd.s32 %s134, %s135
        %s137 = smul.addr %s136, 4
        %s138 = scalar_lea.vmem %s1, %s137
      $region16: #{conv2d_pallas.1} parent=11 // pred_fallthru
        _
    $region12: #{conv2d_pallas.1} parent=5 // pred_fallthru
      _
    %p139 = scmp.lt.s32.totalorder %s8, 2
    // Predicated region
    $region17: #{conv2d_pallas.1} parent=5 // pred_check
      %p140 = pneg %p139
    $region18: #{conv2d_pallas.1} parent=5 // pred_check_branch
      %142 = sbr.rel (%p140) target = $region20
    $region19: #{conv2d_pallas.1} parent=5 // pred_region
      // Predicated region
      $region21: #{conv2d_pallas.1} parent=19 // pred_check
        %p143 = pneg %p49
      $region22: #{conv2d_pallas.1} parent=19 // pred_check_branch
        %145 = sbr.rel (%p143) target = $region24
      $region23: #{conv2d_pallas.1} parent=19 // pred_region
        %s146 = smul.u32 32, %s16
        %p147 = scmp.lt.s32.totalorder %s15, 0
        %s148 = scalar_select %p147, %s15, 0
        %p149 = scmp.lt.s32.totalorder %s146, 63
        %s150 = scalar_select %p149, %s146, 63
        %s151 = smul.addr %s148, 64
        %s152 = sadd.s32 %s150, %s151
        %s153 = smul.addr %s152, 4
        %s154 = scalar_lea.vmem %s0, %s153
        %s155 = smul.u32 32, %s16
      $region24: #{conv2d_pallas.1} parent=19 // pred_fallthru
        _
    $region20: #{conv2d_pallas.1} parent=5 // pred_fallthru
      _
    %p156 = scmp.le.s32.totalorder 1, %s8
    %p157 = scmp.lt.s32.totalorder %s8, 3
    %p158 = pnand %p156, %p157
    %p159 = pneg %p158
    // Predicated region
    $region25: #{conv2d_pallas.1} parent=5 // pred_check
      _
    $region26: #{conv2d_pallas.1} parent=5 // pred_check_branch
      %161 = sbr.rel (%p158) target = $region28
    $region27: #{conv2d_pallas.1} parent=5 // pred_region
      %s162 = ssub.s32 %s8, 1
      %s163 = smul.u32 32, %s19
      %p164 = scmp.lt.s32.totalorder %s18, 0
      %s165 = scalar_select %p164, %s18, 0
      %p166 = scmp.lt.s32.totalorder %s163, 63
      %s167 = scalar_select %p166, %s163, 63
      %s168 = smul.addr %s165, 64
      %s169 = sadd.s32 %s167, %s168
      %s170 = smul.addr %s169, 4
      %s171 = scalar_lea.vmem %s0, %s170
      %p172 = pneg %p55
      %p173 = pneg %p52
      %p174 = scmp.lt.s32.totalorder %s18, 0
      %s175 = scalar_select %p174, %s18, 0
      %p176 = scmp.lt.s32.totalorder %s20, 0
      %s177 = scalar_select %p176, %s20, 0
      %s178 = smul.addr %s175, 16
      %s179 = sadd.s32 %s177, %s178
      %s180 = smul.addr %s179, 4
      %s181 = scalar_lea.vmem %s1, %s180
      %p182 = pneg %p83
      %p183 = pneg %p80
      %p184 = pneg %p113
      %p185 = pneg %p110
      %s186 = smul.u32 32, %s19
      %p187 = scmp.lt.s32.totalorder %s18, 0
      %s188 = scalar_select %p187, %s18, 0
      %p189 = scmp.lt.s32.totalorder %s186, 63
      %s190 = scalar_select %p189, %s186, 63
      %p191 = scmp.lt.s32.totalorder %s20, 0
      %s192 = scalar_select %p191, %s20, 0
      %s193 = sadd.s32 %s192, %s190
      %s194 = smul.addr %s188, 64
      %s195 = sadd.s32 %s193, %s194
      %s196 = smul.addr %s195, 8
      %s197 = scalar_lea.vmem %s2, %s196
      %s198 = smul.u32 32, %s19
      %p199 = scmp.lt.s32.totalorder %s18, 0
      %s200 = scalar_select %p199, %s18, 0
      %p201 = scmp.lt.s32.totalorder %s198, 63
      %s202 = scalar_select %p201, %s198, 63
      %s203 = smul.addr %s200, 64
      %s204 = sadd.s32 %s202, %s203
      %s205 = smul.addr %s204, 4
      %s206 = scalar_lea.vmem %s0, %s205
      %s207 = smul.u32 32, %s19
      %p208 = scmp.lt.s32.totalorder %s18, 0
      %s209 = scalar_select %p208, %s18, 0
      %p210 = scmp.lt.s32.totalorder %s20, 0
      %s211 = scalar_select %p210, %s20, 0
      %s212 = smul.addr %s209, 16
      %s213 = sadd.s32 %s211, %s212
      %s214 = smul.addr %s213, 4
      %s215 = scalar_lea.vmem %s1, %s214
      %s216 = smul.u32 32, %s19
      %p217 = scmp.lt.s32.totalorder %s18, 0
      %s218 = scalar_select %p217, %s18, 0
      %p219 = scmp.lt.s32.totalorder %s216, 63
      %s220 = scalar_select %p219, %s216, 63
      %p221 = scmp.lt.s32.totalorder %s20, 0
      %s222 = scalar_select %p221, %s20, 0
      %s223 = sadd.s32 %s222, %s220
      %s224 = smul.addr %s218, 64
      %s225 = sadd.s32 %s223, %s224
      %s226 = smul.addr %s225, 8
      %s227 = scalar_lea.vmem %s2, %s226
      %s228 = smul.u32 32, %s19
      %v229 = vld [vmem:[%s206] sm:$0xf]
      %v230 = vld [vmem:[%s206 + $0x4] sm:$0xf]
      %v231 = vld [vmem:[%s206 + $0x8] sm:$0xf]
      %v232 = vld [vmem:[%s206 + $0xc] sm:$0xf]
      %v233 = vld [vmem:[%s206 + $0x10] sm:$0xf]
      %v234 = vld [vmem:[%s206 + $0x14] sm:$0xf]
      %v235 = vld [vmem:[%s206 + $0x18] sm:$0xf]
      %v236 = vld [vmem:[%s206 + $0x1c] sm:$0xf]
      %v237 = vld [vmem:[%s206 + $0x20] sm:$0xf]
      %v238 = vld [vmem:[%s206 + $0x24] sm:$0xf]
      %v239 = vld [vmem:[%s206 + $0x28] sm:$0xf]
      %v240 = vld [vmem:[%s206 + $0x2c] sm:$0xf]
      %v241 = vld [vmem:[%s206 + $0x30] sm:$0xf]
      %v242 = vld [vmem:[%s206 + $0x34] sm:$0xf]
      %v243 = vld [vmem:[%s206 + $0x38] sm:$0xf]
      %v244 = vld [vmem:[%s206 + $0x3c] sm:$0xf]
      %v245 = vld [vmem:[%s206 + $0x40] sm:$0xf]
      %v246 = vld [vmem:[%s206 + $0x44] sm:$0xf]
      %v247 = vld [vmem:[%s206 + $0x48] sm:$0xf]
      %v248 = vld [vmem:[%s206 + $0x4c] sm:$0xf]
      %v249 = vld [vmem:[%s206 + $0x50] sm:$0xf]
      %v250 = vld [vmem:[%s206 + $0x54] sm:$0xf]
      %v251 = vld [vmem:[%s206 + $0x58] sm:$0xf]
      %v252 = vld [vmem:[%s206 + $0x5c] sm:$0xf]
      %v253 = vld [vmem:[%s206 + $0x60] sm:$0xf]
      %v254 = vld [vmem:[%s206 + $0x64] sm:$0xf]
      %v255 = vld [vmem:[%s206 + $0x68] sm:$0xf]
      %v256 = vld [vmem:[%s206 + $0x6c] sm:$0xf]
      %v257 = vld [vmem:[%s206 + $0x70] sm:$0xf]
      %v258 = vld [vmem:[%s206 + $0x74] sm:$0xf]
      %v259 = vld [vmem:[%s206 + $0x78] sm:$0xf]
      %v260 = vld [vmem:[%s206 + $0x7c] sm:$0xf]
      %v261 = vld [vmem:[%s215] sm:$0xf]
      %v262 = vld [vmem:[%s215 + $0x4] sm:$0xf]
      %v263 = vld [vmem:[%s215 + $0x8] sm:$0xf]
      %v264 = vld [vmem:[%s215 + $0xc] sm:$0xf]
      %v265 = vld [vmem:[%s215 + $0x10] sm:$0xf]
      %v266 = vld [vmem:[%s215 + $0x14] sm:$0xf]
      %v267 = vld [vmem:[%s215 + $0x18] sm:$0xf]
      %v268 = vld [vmem:[%s215 + $0x1c] sm:$0xf]
      %v269 = vld [vmem:[%s215 + $0x20] sm:$0xf]
      %v270 = vld [vmem:[%s215 + $0x24] sm:$0xf]
      %v271 = vld [vmem:[%s215 + $0x28] sm:$0xf]
      %v272 = vld [vmem:[%s215 + $0x2c] sm:$0xf]
      %v273 = vld [vmem:[%s215 + $0x30] sm:$0xf]
      %v274 = vld [vmem:[%s215 + $0x34] sm:$0xf]
      %v275 = vld [vmem:[%s215 + $0x38] sm:$0xf]
      %v276 = vld [vmem:[%s215 + $0x3c] sm:$0xf]
      %v309 = vunpack.c.l.b16 %v229
      %v310 = vunpack.c.l.b16 %v230
      %v311 = vunpack.c.l.b16 %v231
      %v312 = vunpack.c.l.b16 %v232
      %v313 = vunpack.c.l.b16 %v233
      %v314 = vunpack.c.l.b16 %v234
      %v315 = vunpack.c.l.b16 %v235
      %v316 = vunpack.c.l.b16 %v236
      %v317 = vunpack.c.l.b16 %v237
      %v318 = vunpack.c.l.b16 %v238
      %v319 = vunpack.c.l.b16 %v239
      %v320 = vunpack.c.l.b16 %v240
      %v321 = vunpack.c.l.b16 %v241
      %v322 = vunpack.c.l.b16 %v242
      %v323 = vunpack.c.l.b16 %v243
      %v324 = vunpack.c.l.b16 %v244
      %v325 = vunpack.c.l.b16 %v245
      %v326 = vunpack.c.l.b16 %v246
      %v327 = vunpack.c.l.b16 %v247
      %v328 = vunpack.c.l.b16 %v248
      %v329 = vunpack.c.l.b16 %v249
      %v330 = vunpack.c.l.b16 %v250
      %v331 = vunpack.c.l.b16 %v251
      %v332 = vunpack.c.l.b16 %v252
      %v333 = vunpack.c.l.b16 %v253
      %v334 = vunpack.c.l.b16 %v254
      %v335 = vunpack.c.l.b16 %v255
      %v336 = vunpack.c.l.b16 %v256
      %v337 = vunpack.c.l.b16 %v257
      %v338 = vunpack.c.l.b16 %v258
      %v339 = vunpack.c.l.b16 %v259
      %v340 = vunpack.c.l.b16 %v260
      %v341 = vpack.c.b16 %v310, %v309
      %v342 = vpack.c.b16 %v312, %v311
      %v343 = vpack.c.b16 %v314, %v313
      %v344 = vpack.c.b16 %v316, %v315
      %v345 = vpack.c.b16 %v318, %v317
      %v346 = vpack.c.b16 %v320, %v319
      %v347 = vpack.c.b16 %v322, %v321
      %v348 = vpack.c.b16 %v324, %v323
      %v349 = vpack.c.b16 %v326, %v325
      %v350 = vpack.c.b16 %v328, %v327
      %v351 = vpack.c.b16 %v330, %v329
      %v352 = vpack.c.b16 %v332, %v331
      %v353 = vpack.c.b16 %v334, %v333
      %v354 = vpack.c.b16 %v336, %v335
      %v355 = vpack.c.b16 %v338, %v337
      %v356 = vpack.c.b16 %v340, %v339
      %v389 = vunpack.c.l.b16 %v261
      %v390 = vunpack.c.l.b16 %v262
      %v391 = vunpack.c.l.b16 %v263
      %v392 = vunpack.c.l.b16 %v264
      %v393 = vunpack.c.l.b16 %v265
      %v394 = vunpack.c.l.b16 %v266
      %v395 = vunpack.c.l.b16 %v267
      %v396 = vunpack.c.l.b16 %v268
      %v397 = vunpack.c.l.b16 %v269
      %v398 = vunpack.c.l.b16 %v270
      %v399 = vunpack.c.l.b16 %v271
      %v400 = vunpack.c.l.b16 %v272
      %v401 = vunpack.c.l.b16 %v273
      %v402 = vunpack.c.l.b16 %v274
      %v403 = vunpack.c.l.b16 %v275
      %v404 = vunpack.c.l.b16 %v276
      %v405 = vpack.c.b16 %v390, %v389
      %v406 = vpack.c.b16 %v392, %v391
      %v407 = vpack.c.b16 %v394, %v393
      %v408 = vpack.c.b16 %v396, %v395
      %v409 = vpack.c.b16 %v398, %v397
      %v410 = vpack.c.b16 %v400, %v399
      %v411 = vpack.c.b16 %v402, %v401
      %v412 = vpack.c.b16 %v404, %v403
      %421 = vmatpush.bf16.msra.mxu0 %v412
      %422 = vmatpush.bf16.msra.mxu0 %v411
      %423 = vmatpush.bf16.msra.mxu0 %v410
      %424 = vmatpush.bf16.msra.mxu0 %v409
      %425 = vmatpush.bf16.msra.mxu0 %v408
      %426 = vmatpush.bf16.msra.mxu0 %v407
      %427 = vmatpush.bf16.msra.mxu0 %v406
      %428 = vmatpush.bf16.msra.mxu0 %v405
      %429 = vmatmul.bf16.gmra.mxu0 %v341
      %v430 = vpop.f32.mrf.mxu0
      %v431 = vadd.f32 0.0, %v430
      %v432 = vpop.f32.mrf.mxu0
      %v433 = vadd.f32 0.0, %v432
      %434 = vmatmul.bf16.gmra.mxu0 %v342
      %v435 = vpop.f32.mrf.mxu0
      %v436 = vadd.f32 0.0, %v435
      %v437 = vpop.f32.mrf.mxu0
      %v438 = vadd.f32 0.0, %v437
      %439 = vmatmul.bf16.gmra.mxu0 %v343
      %v440 = vpop.f32.mrf.mxu0
      %v441 = vadd.f32 0.0, %v440
      %v442 = vpop.f32.mrf.mxu0
      %v443 = vadd.f32 0.0, %v442
      %444 = vmatmul.bf16.gmra.mxu0 %v344
      %v445 = vpop.f32.mrf.mxu0
      %v446 = vadd.f32 0.0, %v445
      %v447 = vpop.f32.mrf.mxu0
      %v448 = vadd.f32 0.0, %v447
      %449 = vmatmul.bf16.gmra.mxu0 %v345
      %v450 = vpop.f32.mrf.mxu0
      %v451 = vadd.f32 0.0, %v450
      %v452 = vpop.f32.mrf.mxu0
      %v453 = vadd.f32 0.0, %v452
      %454 = vmatmul.bf16.gmra.mxu0 %v346
      %v455 = vpop.f32.mrf.mxu0
      %v456 = vadd.f32 0.0, %v455
      %v457 = vpop.f32.mrf.mxu0
      %v458 = vadd.f32 0.0, %v457
      %459 = vmatmul.bf16.gmra.mxu0 %v347
      %v460 = vpop.f32.mrf.mxu0
      %v461 = vadd.f32 0.0, %v460
      %v462 = vpop.f32.mrf.mxu0
      %v463 = vadd.f32 0.0, %v462
      %464 = vmatmul.bf16.gmra.mxu0 %v348
      %v465 = vpop.f32.mrf.mxu0
      %v466 = vadd.f32 0.0, %v465
      %v467 = vpop.f32.mrf.mxu0
      %v468 = vadd.f32 0.0, %v467
      %469 = vmatmul.bf16.gmra.mxu0 %v349
      %v470 = vpop.f32.mrf.mxu0
      %v471 = vadd.f32 0.0, %v470
      %v472 = vpop.f32.mrf.mxu0
      %v473 = vadd.f32 0.0, %v472
      %474 = vmatmul.bf16.gmra.mxu0 %v350
      %v475 = vpop.f32.mrf.mxu0
      %v476 = vadd.f32 0.0, %v475
      %v477 = vpop.f32.mrf.mxu0
      %v478 = vadd.f32 0.0, %v477
      %479 = vmatmul.bf16.gmra.mxu0 %v351
      %v480 = vpop.f32.mrf.mxu0
      %v481 = vadd.f32 0.0, %v480
      %v482 = vpop.f32.mrf.mxu0
      %v483 = vadd.f32 0.0, %v482
      %484 = vmatmul.bf16.gmra.mxu0 %v352
      %v485 = vpop.f32.mrf.mxu0
      %v486 = vadd.f32 0.0, %v485
      %v487 = vpop.f32.mrf.mxu0
      %v488 = vadd.f32 0.0, %v487
      %489 = vmatmul.bf16.gmra.mxu0 %v353
      %v490 = vpop.f32.mrf.mxu0
      %v491 = vadd.f32 0.0, %v490
      %v492 = vpop.f32.mrf.mxu0
      %v493 = vadd.f32 0.0, %v492
      %494 = vmatmul.bf16.gmra.mxu0 %v354
      %v495 = vpop.f32.mrf.mxu0
      %v496 = vadd.f32 0.0, %v495
      %v497 = vpop.f32.mrf.mxu0
      %v498 = vadd.f32 0.0, %v497
      %499 = vmatmul.bf16.gmra.mxu0 %v355
      %v500 = vpop.f32.mrf.mxu0
      %v501 = vadd.f32 0.0, %v500
      %v502 = vpop.f32.mrf.mxu0
      %v503 = vadd.f32 0.0, %v502
      %504 = vmatmul.bf16.gmra.mxu0 %v356
      %v505 = vpop.f32.mrf.mxu0
      %v506 = vadd.f32 0.0, %v505
      %v507 = vpop.f32.mrf.mxu0
      %v508 = vadd.f32 0.0, %v507
      %509 = vdwg.mxu0
      %510 = vst [vmem:[%s227] sm:$0xff] %v431
      %511 = vst [vmem:[%s227 + $0x8] sm:$0xff] %v433
      %512 = vst [vmem:[%s227 + $0x10] sm:$0xff] %v436
      %513 = vst [vmem:[%s227 + $0x18] sm:$0xff] %v438
      %514 = vst [vmem:[%s227 + $0x20] sm:$0xff] %v441
      %515 = vst [vmem:[%s227 + $0x28] sm:$0xff] %v443
      %516 = vst [vmem:[%s227 + $0x30] sm:$0xff] %v446
      %517 = vst [vmem:[%s227 + $0x38] sm:$0xff] %v448
      %518 = vst [vmem:[%s227 + $0x40] sm:$0xff] %v451
      %519 = vst [vmem:[%s227 + $0x48] sm:$0xff] %v453
      %520 = vst [vmem:[%s227 + $0x50] sm:$0xff] %v456
      %521 = vst [vmem:[%s227 + $0x58] sm:$0xff] %v458
      %522 = vst [vmem:[%s227 + $0x60] sm:$0xff] %v461
      %523 = vst [vmem:[%s227 + $0x68] sm:$0xff] %v463
      %524 = vst [vmem:[%s227 + $0x70] sm:$0xff] %v466
      %525 = vst [vmem:[%s227 + $0x78] sm:$0xff] %v468
      %526 = vst [vmem:[%s227 + $0x80] sm:$0xff] %v471
      %527 = vst [vmem:[%s227 + $0x88] sm:$0xff] %v473
      %528 = vst [vmem:[%s227 + $0x90] sm:$0xff] %v476
      %529 = vst [vmem:[%s227 + $0x98] sm:$0xff] %v478
      %530 = vst [vmem:[%s227 + $0xa0] sm:$0xff] %v481
      %531 = vst [vmem:[%s227 + $0xa8] sm:$0xff] %v483
      %532 = vst [vmem:[%s227 + $0xb0] sm:$0xff] %v486
      %533 = vst [vmem:[%s227 + $0xb8] sm:$0xff] %v488
      %534 = vst [vmem:[%s227 + $0xc0] sm:$0xff] %v491
      %535 = vst [vmem:[%s227 + $0xc8] sm:$0xff] %v493
      %536 = vst [vmem:[%s227 + $0xd0] sm:$0xff] %v496
      %537 = vst [vmem:[%s227 + $0xd8] sm:$0xff] %v498
      %538 = vst [vmem:[%s227 + $0xe0] sm:$0xff] %v501
      %539 = vst [vmem:[%s227 + $0xe8] sm:$0xff] %v503
      %540 = vst [vmem:[%s227 + $0xf0] sm:$0xff] %v506
      %541 = vst [vmem:[%s227 + $0xf8] sm:$0xff] %v508
      %s542 = smul.u32 32, %s19
      %p543 = scmp.lt.s32.totalorder %s18, 0
      %s544 = scalar_select %p543, %s18, 0
      %p545 = scmp.lt.s32.totalorder %s542, 63
      %s546 = scalar_select %p545, %s542, 63
      %p547 = scmp.lt.s32.totalorder %s20, 0
      %s548 = scalar_select %p547, %s20, 0
      %s549 = sadd.s32 %s548, %s546
      %s550 = smul.addr %s544, 64
      %s551 = sadd.s32 %s549, %s550
      %s552 = smul.addr %s551, 8
      %s553 = scalar_lea.vmem %s2, %s552
      // Predicated region
      $region29: #{conv2d_pallas.1} parent=27 // pred_check
        %p554 = pneg %p110
      $region30: #{conv2d_pallas.1} parent=27 // pred_check_branch
        %556 = sbr.rel (%p554) target = $region32
      $region31: #{conv2d_pallas.1} parent=27 // pred_region
        %s557 = smul.u32 32, %s19
      $region32: #{conv2d_pallas.1} parent=27 // pred_fallthru
        _
    $region28: #{conv2d_pallas.1} parent=5 // pred_fallthru
      _
    %p558 = scmp.le.s32.totalorder 2, %s8
    // Predicated region
    $region33: #{conv2d_pallas.1} parent=5 // pred_check
      %p559 = pneg %p558
    $region34: #{conv2d_pallas.1} parent=5 // pred_check_branch
      %561 = sbr.rel (%p559) target = $region36
    $region35: #{conv2d_pallas.1} parent=5 // pred_region
      %s562 = ssub.s32 %s8, 2
      // Predicated region
      $region37: #{conv2d_pallas.1} parent=35 // pred_check
        %p563 = pneg %p116
      $region38: #{conv2d_pallas.1} parent=35 // pred_check_branch
        %565 = sbr.rel (%p563) target = $region40
      $region39: #{conv2d_pallas.1} parent=35 // pred_region
        %s566 = smul.u32 32, %s22
        %p567 = scmp.lt.s32.totalorder %s21, 0
        %s568 = scalar_select %p567, %s21, 0
        %p569 = scmp.lt.s32.totalorder %s566, 63
        %s570 = scalar_select %p569, %s566, 63
        %p571 = scmp.lt.s32.totalorder %s23, 0
        %s572 = scalar_select %p571, %s23, 0
        %s573 = sadd.s32 %s572, %s570
        %s574 = smul.addr %s568, 64
        %s575 = sadd.s32 %s573, %s574
        %s576 = smul.addr %s575, 8
        %s577 = scalar_lea.vmem %s2, %s576
      $region40: #{conv2d_pallas.1} parent=35 // pred_fallthru
        _
    $region36: #{conv2d_pallas.1} parent=5 // pred_fallthru
      _
  $region6: #{conv2d_pallas.1} parent=0 // loop_footer
    %s12 = sadd.s32 1, %s8
  $region7: #{conv2d_pallas.1} parent=0 // loop_footer_branch
    %7 = sbr.rel target = $region3
  $region8: #{conv2d_pallas.1} parent=0 // loop_exit
    _

</llo_original>
